<compile_context>
chip_gen: v7x
topology: tpu7x:2x2x1
jax: 0.10.0
libtpu: 0.0.40
codegen_flags: <defaults>
</compile_context>

<pallas_src>
import math

import jax
import jax.numpy as jnp
import numpy as np
from jax.experimental import pallas as pl
from jax.experimental.pallas import tpu as pltpu


def _seg_head_kernel(x_ref, w_ref, b_ref, o_ref):
    # x_ref: (1, C_in, T)      current batch element, spatial tile
    # w_ref: (C_out, C_in)     stacked 1x1-conv weights (all three heads)
    # b_ref: (C_out, 1)        stacked biases
    # o_ref: (1, C_out, T)     fused output tile
    x = x_ref[0]                                      # (C_in, T)
    w = w_ref[...]                                    # (C_out, C_in)
    b = b_ref[...].astype(jnp.float32)                # (C_out, 1)

    # 1x1 conv == channel matmul on the MXU; f32 accumulation; bias broadcasts
    # along the lane (spatial) axis.
    y = jnp.dot(w, x, preferred_element_type=jnp.float32) + b   # (C_out, T) f32

    c_out = o_ref.shape[1]

    # Linear heads (segmentation + instance offset): plain store.
    o_ref[0, :c_out - 1, :] = y[:c_out - 1, :].astype(o_ref.dtype)

    # Instance-center head: sigmoid on the single last channel only (EUP work
    # limited to one row instead of the whole tile).
    ctr = y[c_out - 1:c_out, :]                       # (1, T)
    o_ref[0, c_out - 1:, :] = (1.0 / (1.0 + jnp.exp(-ctr))).astype(o_ref.dtype)


def _pick_spatial_tile(hw, bytes_per_pixel, target_bytes=4 << 20, max_tile=32768):
    """Spatial tile: multiple of 128, sized so (x block + out block) stays
    within a VMEM byte budget. If HW fits entirely, use the full extent
    (always a legal block)."""
    t = target_bytes // max(1, bytes_per_pixel)
    t = max(128, min(max_tile, (t // 128) * 128))
    return hw if hw <= t else t


def segmentation_head_forward(x, w_all, b_all, n_classes, downsample_factor):
    """x: (B, C_in, H, W) NCHW; w_all: (n_classes+3, C_in); b_all: (n_classes+3,)."""
    B, C_in, H, W = x.shape
    C_out = w_all.shape[0]
    HW = H * W
    itemsize = jnp.dtype(x.dtype).itemsize

    T = _pick_spatial_tile(HW, (C_in + C_out) * itemsize)
    n_tiles = pl.cdiv(HW, T)

    x_flat = x.reshape(B, C_in, HW)
    b2 = b_all.reshape(C_out, 1)

    out = pl.pallas_call(
        _seg_head_kernel,
        out_shape=jax.ShapeDtypeStruct((B, C_out, HW), x.dtype),
        grid_spec=pltpu.PrefetchScalarGridSpec(
            num_scalar_prefetch=0,
            grid=(B, n_tiles),
            in_specs=[
                pl.BlockSpec((1, C_in, T), lambda b, t: (b, 0, t)),
                pl.BlockSpec((C_out, C_in), lambda b, t: (0, 0)),
                pl.BlockSpec((C_out, 1), lambda b, t: (0, 0)),
            ],
            out_specs=pl.BlockSpec((1, C_out, T), lambda b, t: (b, 0, t)),
        ),
        compiler_params=pltpu.CompilerParams(
            dimension_semantics=("parallel", "parallel"),
            vmem_limit_bytes=32 * 1024 * 1024,
        ),
    )(x_flat, w_all, b2)

    out = out.reshape(B, C_out, H, W)
    ds = downsample_factor
    return {
        f"bev_segmentation_{ds}": out[:, :n_classes],
        f"bev_instance_offset_{ds}": out[:, n_classes:n_classes + 2],
        f"bev_instance_center_{ds}": out[:, n_classes + 2:],
    }


def _reference(x, w_all, b_all, n_classes, downsample_factor):
    # Pure-JAX reference mirroring the PyTorch forward (1x1 convs = einsum).
    y = jnp.einsum("oc,bchw->bohw", w_all, x) + b_all[None, :, None, None]
    ds = downsample_factor
    seg = y[:, :n_classes]
    off = y[:, n_classes:n_classes + 2]
    ctr = 1.0 / (1.0 + jnp.exp(-y[:, n_classes + 2:]))
    return {
        f"bev_segmentation_{ds}": seg,
        f"bev_instance_offset_{ds}": off,
        f"bev_instance_center_{ds}": ctr,
    }


if __name__ == "__main__":
    # Small shapes consistent with the module.
    B, C_in, H, W = 2, 32, 16, 16
    n_classes = 8
    downsample_factor = 1
    C_out = n_classes + 2 + 1          # seg + offset(2) + center(1)

    key = jax.random.PRNGKey(0)
    kx, kw, kb = jax.random.split(key, 3)

    x = jax.random.normal(kx, (B, C_in, H, W), dtype=jnp.float32)

    # Deterministic init roughly matching nn.Conv2d's U(-1/sqrt(fan_in), ...).
    bound = 1.0 / math.sqrt(C_in)
    w_all = jax.random.uniform(kw, (C_out, C_in), minval=-bound, maxval=bound,
                               dtype=jnp.float32)
    b_all = jax.random.uniform(kb, (C_out,), minval=-bound, maxval=bound,
                               dtype=jnp.float32)

    out = segmentation_head_forward(x, w_all, b_all, n_classes, downsample_factor)
    out = jax.block_until_ready(out)

    ref = _reference(x, w_all, b_all, n_classes, downsample_factor)
    for k in ref:
        np.testing.assert_allclose(np.asarray(out[k]), np.asarray(ref[k]),
                                   rtol=1e-5, atol=1e-5)

    print("KERNEL_OK")
</pallas_src>

<mosaic_0001>
module attributes {stable_mosaic.version = 11 : i64} {
  func.func @_seg_head_kernel(%arg0: i32, %arg1: i32, %arg2: memref<1x32x256xf32, #tpu.memory_space<vmem>>, %arg3: memref<11x32xf32, #tpu.memory_space<vmem>>, %arg4: memref<11x1xf32, #tpu.memory_space<vmem>>, %arg5: memref<1x11x256xf32, #tpu.memory_space<vmem>>) attributes {dimension_semantics = [#tpu.dimension_semantics<parallel>, #tpu.dimension_semantics<parallel>], iteration_bounds = array<i64: 2, 1>, scalar_prefetch = 0 : i64, scratch_operands = 0 : i64, tpu.core_type = #tpu.core_type<tc>, window_params = [{transform_indices = @transform_0, window_bounds = array<i64: 1, 32, 256>}, {pipeline_mode = #tpu.pipeline_mode<synchronous>, transform_indices = @transform_1, window_bounds = array<i64: 11, 32>}, {pipeline_mode = #tpu.pipeline_mode<synchronous>, transform_indices = @transform_2, window_bounds = array<i64: 11, 1>}, {transform_indices = @transform_3, window_bounds = array<i64: 1, 11, 256>}]} {
    %c0 = arith.constant 0 : index
    %c0_0 = arith.constant 0 : index
    %c0_1 = arith.constant 0 : index
    %0 = vector.load %arg2[%c0, %c0_0, %c0_1] : memref<1x32x256xf32, #tpu.memory_space<vmem>>, vector<1x32x256xf32>
    %1 = vector.shape_cast %0 : vector<1x32x256xf32> to vector<32x256xf32>
    %c0_2 = arith.constant 0 : index
    %c0_3 = arith.constant 0 : index
    %2 = vector.load %arg3[%c0_2, %c0_3] : memref<11x32xf32, #tpu.memory_space<vmem>>, vector<11x32xf32>
    %c0_4 = arith.constant 0 : index
    %c0_5 = arith.constant 0 : index
    %3 = vector.load %arg4[%c0_4, %c0_5] : memref<11x1xf32, #tpu.memory_space<vmem>>, vector<11x1xf32>
    %cst = arith.constant dense<0.000000e+00> : vector<11x256xf32>
    %4 = tpu.matmul %2, %1, %cst {dimension_numbers = #tpu.dot_dimension_numbers<[1], [0], [0], [1], [0, 0, 1, 1], [], []>} : vector<11x32xf32>, vector<32x256xf32>, vector<11x256xf32> -> vector<11x256xf32>
    %5 = vector.broadcast %3 : vector<11x1xf32> to vector<11x256xf32>
    %6 = arith.addf %4, %5 : vector<11x256xf32>
    %7 = vector.extract_strided_slice %6 {offsets = [0, 0], sizes = [10, 256], strides = [1, 1]} : vector<11x256xf32> to vector<10x256xf32>
    %c0_6 = arith.constant 0 : index
    %c0_7 = arith.constant 0 : index
    %c0_8 = arith.constant 0 : index
    %8 = vector.load %arg5[%c0_6, %c0_7, %c0_8] : memref<1x11x256xf32, #tpu.memory_space<vmem>>, vector<1x10x256xf32>
    %9 = vector.shape_cast %8 : vector<1x10x256xf32> to vector<10x256xf32>
    %10 = vector.shape_cast %7 : vector<10x256xf32> to vector<1x10x256xf32>
    tpu.vector_store %arg5[%c0_6, %c0_7, %c0_8], %10 {strides = array<i32>} : memref<1x11x256xf32, #tpu.memory_space<vmem>>, vector<1x10x256xf32>,
    %11 = vector.extract_strided_slice %6 {offsets = [10, 0], sizes = [1, 256], strides = [1, 1]} : vector<11x256xf32> to vector<1x256xf32>
    %cst_9 = arith.constant 0.000000e+00 : f32
    %12 = vector.broadcast %cst_9 : f32 to vector<1x256xf32>
    %13 = arith.subf %12, %11 : vector<1x256xf32>
    %14 = math.exp %13 : vector<1x256xf32>
    %cst_10 = arith.constant 1.000000e+00 : f32
    %15 = vector.broadcast %cst_10 : f32 to vector<1x256xf32>
    %16 = arith.addf %15, %14 : vector<1x256xf32>
    %cst_11 = arith.constant 1.000000e+00 : f32
    %17 = vector.broadcast %cst_11 : f32 to vector<1x256xf32>
    %18 = arith.divf %17, %16 : vector<1x256xf32>
    %c0_12 = arith.constant 0 : index
    %c10 = arith.constant 10 : index
    %c0_13 = arith.constant 0 : index
    %19 = vector.load %arg5[%c0_12, %c10, %c0_13] : memref<1x11x256xf32, #tpu.memory_space<vmem>>, vector<1x1x256xf32>
    %20 = vector.shape_cast %19 : vector<1x1x256xf32> to vector<1x256xf32>
    %21 = vector.shape_cast %18 : vector<1x256xf32> to vector<1x1x256xf32>
    tpu.vector_store %arg5[%c0_12, %c10, %c0_13], %21 {strides = array<i32>} : memref<1x11x256xf32, #tpu.memory_space<vmem>>, vector<1x1x256xf32>,
    return
  }
  func.func @transform_0(%arg0: i32, %arg1: i32) -> (i32, i32, i32) {
    %c0_i32 = arith.constant 0 : i32
    %c0_i32_0 = arith.constant 0 : i32
    return %arg0, %c0_i32, %arg1 : i32, i32, i32
  }
  func.func @transform_1(%arg0: i32, %arg1: i32) -> (i32, i32) {
    %c0_i32 = arith.constant 0 : i32
    %c0_i32_0 = arith.constant 0 : i32
    %c0_i32_1 = arith.constant 0 : i32
    return %c0_i32, %c0_i32_0 : i32, i32
  }
  func.func @transform_2(%arg0: i32, %arg1: i32) -> (i32, i32) {
    %c0_i32 = arith.constant 0 : i32
    %c0_i32_0 = arith.constant 0 : i32
    %c0_i32_1 = arith.constant 0 : i32
    return %c0_i32, %c0_i32_0 : i32, i32
  }
  func.func @transform_3(%arg0: i32, %arg1: i32) -> (i32, i32, i32) {
    %c0_i32 = arith.constant 0 : i32
    %c0_i32_0 = arith.constant 0 : i32
    return %arg0, %c0_i32, %arg1 : i32, i32, i32
  }
}

</mosaic_0001>

<llo_original>
// kernel: tpu_custom_call.1
$region0: #{tpu_custom_call.1}
  #allocation0 [shape = 'u32[]', space=smem, size = 0x4, offset = 0x4, fixed_abs, tag = 'smem constant byte address 0x4 - core index']
  #allocation1 [shape = 'u32[144,128]{1,0:T(1,128)}', space=vmem, size = 0x12000, scoped, tag = 'internal scratch']
  %s0 = inlined_call_operand.hbm [shape: f32[2,32,256], index: 0, kind: input, shape index: {}]
  %s1 = inlined_call_operand.vmem [shape: f32[11,32], index: 1, kind: input, shape index: {}]
  %s2 = inlined_call_operand.vmem [shape: f32[11,1], index: 2, kind: input, shape index: {}]
  %s3 = inlined_call_operand.vmem [shape: f32[2,11,256], index: 3, kind: output, shape index: {}]
  %s4 = sld [smem:[#allocation0]]
  $region49: #{tpu_custom_call.1} parent=0
    _
  %s6 = ssub.s32 1, %s4
  %s7 = scalar_select 0, %s6, %s4
  $region1: #{tpu_custom_call.1} parent=0
    #allocation2 [shape = 'u8[65536]{0}', space=vmem, size = 0x10000, scoped, tag = 'input window, operand 0']
    #allocation3 [shape = 's32[2]{0}', space=sflag, size = 0x8, scoped, tag = 'scoped memory for tpu_custom_call.1']
    %8 = vsyncpa [#allocation3], 0
    %s9 = scalar_lea.sflag [#allocation3], 1
    %10 = vsyncpa %s9, 0
    loop: start=0, step=1, limit=4
    $region2: #{tpu_custom_call.1} parent=1 // loop_pre_header
      _
    $region3: #{tpu_custom_call.1} parent=1 // loop_header
      %s12 = sphi 0, %s16
      %p13 = scmp.ge.s32.totalorder %s12, 4
      %s19 = sphi 0, %s31
      %s20 = sphi 0, %s27
      %s21 = sphi 0, %s19
      %s22 = sphi 0, %s20
      %s23 = sphi 0, %s21
      %s24 = sphi 0, %s22
      %s36 = sphi 0, %s38
      %s39 = sphi 0, %s36
      %s40 = sphi 0, %s39
      %s56 = sphi 0, %s40
      %s60 = sphi 0, %s60
      %s62 = sphi 0, %s60
      %s63 = sphi 0, %s62
      %s77 = sphi 0, %s63
      %s81 = sphi 0, %s81
      %s83 = sphi 0, %s81
      %s84 = sphi 0, %s83
      %s98 = sphi 0, %s84
      %s106 = sphi 0, %s108
      %s109 = sphi 0, %s106
      %s110 = sphi 0, %s109
      %s126 = sphi 0, %s110
    $region4: #{tpu_custom_call.1} parent=1 // loop_header_branch
      %15 = sbr.rel (%p13) target = $region8
    $region5: #{tpu_custom_call.1} parent=1 // loop_body
      %s17 = ssub.s32 %s12, 1
      %s18 = ssub.s32 %s12, 2
      %s25 = sadd.s32 1, %s20
      %p26 = scmp.ge.s32.totalorder %s25, 1
      %s27 = scalar_select %p26, 0, %s25
      %s28 = sadd.s32 1, %s19
      %s29 = scalar_select %p26, %s28, %s19
      %p30 = scmp.ge.s32.totalorder %s29, 2
      %s31 = scalar_select %p30, 0, %s29
      %s32 = ssub.s32 %s19, %s31
      %s33 = ssub.s32 %s20, %s27
      %s34 = sor.u32 %s32, %s33
      %p35 = scmp.eq.s32.totalorder %s34, 0
      %s37 = sadd.s32 %s36, 1
      %s38 = scalar_select %p35, %s36, %s37
      %p41 = pneg %p35
      %p42 = scmp.eq.s32.totalorder %s12, 1
      %p43 = por %p41, %p42
      %p44 = scmp.ne.s32.totalorder %s36, %s39
      %p45 = scmp.eq.s32.totalorder %s12, 0
      %p46 = por %p44, %p45
      %p47 = scmp.ne.s32.totalorder %s36, %s39
      %p48 = scmp.eq.s32.totalorder %s17, 1
      %p49 = por %p47, %p48
      %p50 = scmp.ne.s32.totalorder %s39, %s40
      %p51 = scmp.eq.s32.totalorder %s17, 0
      %p52 = por %p50, %p51
      %p53 = scmp.ne.s32.totalorder %s39, %s40
      %p54 = scmp.eq.s32.totalorder %s18, 1
      %p55 = por %p53, %p54
      %p57 = scmp.ne.s32.totalorder %s40, %s56
      %p58 = scmp.eq.s32.totalorder %s18, 0
      %p59 = por %p57, %p58
      %s61 = sadd.s32 %s60, 1
      %p64 = scmp.eq.s32.totalorder %s12, 1
      %p65 = scmp.ne.s32.totalorder %s60, %s62
      %p66 = scmp.eq.s32.totalorder %s12, 0
      %p67 = por %p65, %p66
      %p68 = scmp.ne.s32.totalorder %s60, %s62
      %p69 = scmp.eq.s32.totalorder %s17, 1
      %p70 = por %p68, %p69
      %p71 = scmp.ne.s32.totalorder %s62, %s63
      %p72 = scmp.eq.s32.totalorder %s17, 0
      %p73 = por %p71, %p72
      %p74 = scmp.ne.s32.totalorder %s62, %s63
      %p75 = scmp.eq.s32.totalorder %s18, 1
      %p76 = por %p74, %p75
      %p78 = scmp.ne.s32.totalorder %s63, %s77
      %p79 = scmp.eq.s32.totalorder %s18, 0
      %p80 = por %p78, %p79
      %s82 = sadd.s32 %s81, 1
      %p85 = scmp.eq.s32.totalorder %s12, 1
      %p86 = scmp.ne.s32.totalorder %s81, %s83
      %p87 = scmp.eq.s32.totalorder %s12, 0
      %p88 = por %p86, %p87
      %p89 = scmp.ne.s32.totalorder %s81, %s83
      %p90 = scmp.eq.s32.totalorder %s17, 1
      %p91 = por %p89, %p90
      %p92 = scmp.ne.s32.totalorder %s83, %s84
      %p93 = scmp.eq.s32.totalorder %s17, 0
      %p94 = por %p92, %p93
      %p95 = scmp.ne.s32.totalorder %s83, %s84
      %p96 = scmp.eq.s32.totalorder %s18, 1
      %p97 = por %p95, %p96
      %p99 = scmp.ne.s32.totalorder %s84, %s98
      %p100 = scmp.eq.s32.totalorder %s18, 0
      %p101 = por %p99, %p100
      %s102 = ssub.s32 %s19, %s31
      %s103 = ssub.s32 %s20, %s27
      %s104 = sor.u32 %s102, %s103
      %p105 = scmp.eq.s32.totalorder %s104, 0
      %s107 = sadd.s32 %s106, 1
      %s108 = scalar_select %p105, %s106, %s107
      %p111 = pneg %p105
      %p112 = scmp.eq.s32.totalorder %s12, 1
      %p113 = por %p111, %p112
      %p114 = scmp.ne.s32.totalorder %s106, %s109
      %p115 = scmp.eq.s32.totalorder %s12, 0
      %p116 = por %p114, %p115
      %p117 = scmp.ne.s32.totalorder %s106, %s109
      %p118 = scmp.eq.s32.totalorder %s17, 1
      %p119 = por %p117, %p118
      %p120 = scmp.ne.s32.totalorder %s109, %s110
      %p121 = scmp.eq.s32.totalorder %s17, 0
      %p122 = por %p120, %p121
      %p123 = scmp.ne.s32.totalorder %s109, %s110
      %p124 = scmp.eq.s32.totalorder %s18, 1
      %p125 = por %p123, %p124
      %p127 = scmp.ne.s32.totalorder %s110, %s126
      %p128 = scmp.eq.s32.totalorder %s18, 0
      %p129 = por %p127, %p128
      %p130 = scmp.le.s32.totalorder 1, %s12
      %p131 = scmp.lt.s32.totalorder %s12, 3
      %p132 = pnand %p130, %p131
      %p133 = pneg %p132
      // Predicated region
      $region9: #{tpu_custom_call.1} parent=5 // pred_check
        _
      $region10: #{tpu_custom_call.1} parent=5 // pred_check_branch
        %135 = sbr.rel (%p132) target = $region12
      $region11: #{tpu_custom_call.1} parent=5 // pred_region
        %s136 = ssub.s32 %s12, 1
        // Predicated region
        $region13: #{tpu_custom_call.1} parent=11 // pred_check
          %p137 = pneg %p73
        $region14: #{tpu_custom_call.1} parent=11 // pred_check_branch
          %139 = sbr.rel (%p137) target = $region16
        $region15: #{tpu_custom_call.1} parent=11 // pred_region
          _
        $region16: #{tpu_custom_call.1} parent=11 // pred_fallthru
          _
        // Predicated region
        $region17: #{tpu_custom_call.1} parent=11 // pred_check
          %p140 = pneg %p94
        $region18: #{tpu_custom_call.1} parent=11 // pred_check_branch
          %142 = sbr.rel (%p140) target = $region20
        $region19: #{tpu_custom_call.1} parent=11 // pred_region
          _
        $region20: #{tpu_custom_call.1} parent=11 // pred_fallthru
          _
      $region12: #{tpu_custom_call.1} parent=5 // pred_fallthru
        _
      %p143 = scmp.lt.s32.totalorder %s12, 2
      // Predicated region
      $region21: #{tpu_custom_call.1} parent=5 // pred_check
        %p144 = pneg %p143
      $region22: #{tpu_custom_call.1} parent=5 // pred_check_branch
        %146 = sbr.rel (%p144) target = $region24
      $region23: #{tpu_custom_call.1} parent=5 // pred_region
        // Predicated region
        $region25: #{tpu_custom_call.1} parent=23 // pred_check
          %p147 = pneg %p46
        $region26: #{tpu_custom_call.1} parent=23 // pred_check_branch
          %149 = sbr.rel (%p147) target = $region28
        $region27: #{tpu_custom_call.1} parent=23 // pred_region
          %s150 = sand.u32 %s36, 1
          %s151 = scalar_lea.sflag [#allocation3], %s150
          %s152 = sand.u32 %s36, 1
          %s153 = smul.addr %s152, 64
          %s154 = scalar_lea.vmem [#allocation2], %s153
          %s155 = smul.u32 2, %s20
          %s157 = ssub.s32 1024, 1024
          %158 = vsyncadd %s151, %s157
          %s159 = smul.addr %s19, 8
          %s160 = sadd.s32 %s155, %s159
          %s161 = smul.addr %s160, 128
          %s162 = scalar_lea.hbm %s0, %s161
          %s163 = sshll.u32 %s154, 4
          %s164 = int_to_ptr.vmem [resolvable:$true] %s163
          %169 = dma.hbm_to_vmem [thread:$0]  %s162, 1024, %s164, %s151, 256, 256, 16
        $region28: #{tpu_custom_call.1} parent=23 // pred_fallthru
          _
      $region24: #{tpu_custom_call.1} parent=5 // pred_fallthru
        _
      %p170 = scmp.le.s32.totalorder 1, %s12
      %p171 = scmp.lt.s32.totalorder %s12, 3
      %p172 = pnand %p170, %p171
      %p173 = pneg %p172
      // Predicated region
      $region29: #{tpu_custom_call.1} parent=5 // pred_check
        _
      $region30: #{tpu_custom_call.1} parent=5 // pred_check_branch
        %175 = sbr.rel (%p172) target = $region32
      $region31: #{tpu_custom_call.1} parent=5 // pred_region
        %s176 = ssub.s32 %s12, 1
        %s177 = sand.u32 %s39, 1
        %s178 = scalar_lea.sflag [#allocation3], %s177
        %s179 = sand.u32 %s39, 1
        %s180 = smul.addr %s179, 64
        %s181 = scalar_lea.vmem [#allocation2], %s180
        // Predicated region
        $region33: #{tpu_custom_call.1} parent=31 // pred_check
          %p182 = pneg %p52
        $region34: #{tpu_custom_call.1} parent=31 // pred_check_branch
          %184 = sbr.rel (%p182) target = $region36
        $region35: #{tpu_custom_call.1} parent=31 // pred_region
          %185 = dma.done %s178, 1024
        $region36: #{tpu_custom_call.1} parent=31 // pred_fallthru
          _
        %s186 = sand.u32 %s39, 1
        %s187 = scalar_lea.sflag [#allocation3], %s186
        %s188 = sand.u32 %s39, 1
        %s189 = smul.addr %s188, 64
        %s190 = scalar_lea.vmem [#allocation2], %s189
        %p191 = pneg %p52
        %p192 = pneg %p49
        %p193 = pneg %p73
        %p194 = pneg %p70
        %p195 = pneg %p94
        %p196 = pneg %p91
        %p197 = pneg %p122
        %p198 = pneg %p119
        %s199 = smul.u32 2, %s22
        %p200 = scmp.lt.s32.totalorder %s21, 1
        %s201 = scalar_select %p200, %s21, 1
        %p202 = scmp.lt.s32.totalorder %s199, 1
        %s203 = scalar_select %p202, %s199, 1
        %s204 = smul.addr %s201, 4
        %s205 = sadd.s32 %s203, %s204
        %s206 = smul.addr %s205, 8
        %s207 = scalar_lea.vmem %s3, %s206
        %s208 = smul.u32 2, %s22
        %s209 = smul.u32 2, %s22
        %p210 = scmp.lt.s32.totalorder %s21, 1
        %s211 = scalar_select %p210, %s21, 1
        %p212 = scmp.lt.s32.totalorder %s209, 1
        %s213 = scalar_select %p212, %s209, 1
        %s214 = smul.addr %s211, 4
        %s215 = sadd.s32 %s213, %s214
        %s216 = smul.addr %s215, 8
        %s217 = scalar_lea.vmem %s3, %s216
        %s218 = smul.u32 2, %s22
        %v219 = vld [vmem:[%s181] sm:$0xff]
        %v220 = vld [vmem:[%s181 + $0x8] sm:$0xff]
        %v221 = vld [vmem:[%s181 + $0x10] sm:$0xff]
        %v222 = vld [vmem:[%s181 + $0x18] sm:$0xff]
        %v223 = vld [vmem:[%s181 + $0x20] sm:$0xff]
        %v224 = vld [vmem:[%s181 + $0x28] sm:$0xff]
        %v225 = vld [vmem:[%s181 + $0x30] sm:$0xff]
        %v226 = vld [vmem:[%s181 + $0x38] sm:$0xff]
        %v227 = vld [vmem:[%s1] sm:$0xff]
        %v228 = vld [vmem:[%s1 + $0x8] sm:$0x7]
        %v229 = vld [vmem:[%s2] sm:$0xff]
        %v230 = vld [vmem:[%s2 + $0x8] sm:$0x7]
        %232 = vset.pattern.permute.xlu0 0
        %233 = vperm.xlu0 %232, %v229
        %v234 = vpop.permute.xlu0 %233
        %237 = vset.pattern.permute.xlu0 0
        %238 = vperm.xlu0 %237, %v230
        %v239 = vpop.permute.xlu0 %238
        %vm241 = vcmask 261120
        %v243 = vsel %vm241, %v227, 0
        %v246 = vsel %vm241, %v228, 0
        %248 = vmatprep.subr.mxu0 %v220
        %249 = vmatpush1.msra.mxu0 %v219
        %250 = vmatprep.subr.mxu0 %v222
        %251 = vmatpush1.msra.mxu0 %v221
        %252 = vmatprep.subr.mxu0 %v224
        %253 = vmatpush1.msra.mxu0 %v223
        %254 = vmatprep.subr.mxu0 %v226
        %255 = vmatpush1.msra.mxu0 %v225
        %256 = vmatprep.subr.mxu0 0.0
        %257 = vmatpush1.msra.mxu0 0.0
        %258 = vmatprep.subr.mxu0 0.0
        %259 = vmatpush1.msra.mxu0 0.0
        %260 = vmatprep.subr.mxu0 0.0
        %261 = vmatpush1.msra.mxu0 0.0
        %262 = vmatprep.subr.mxu0 0.0
        %263 = vmatpush1.msra.mxu0 0.0
        %264 = vmatprep.subr.mxu0 0.0
        %265 = vmatpush1.msra.mxu0 0.0
        %266 = vmatprep.subr.mxu0 0.0
        %267 = vmatpush1.msra.mxu0 0.0
        %268 = vmatprep.subr.mxu0 0.0
        %269 = vmatpush1.msra.mxu0 0.0
        %270 = vmatprep.subr.mxu0 0.0
        %271 = vmatpush1.msra.mxu0 0.0
        %272 = vmatprep.subr.mxu0 0.0
        %273 = vmatpush1.msra.mxu0 0.0
        %274 = vmatprep.subr.mxu0 0.0
        %275 = vmatpush1.msra.mxu0 0.0
        %276 = vmatprep.subr.mxu0 0.0
        %277 = vmatpush1.msra.mxu0 0.0
        %278 = vmatprep.subr.mxu0 0.0
        %279 = vmatpush1.msra.mxu0 0.0
        %280 = vmatprep.subr.mxu0 0.0
        %281 = vmatpush1.msra.mxu0 0.0
        %282 = vmatprep.subr.mxu0 0.0
        %283 = vmatpush1.msra.mxu0 0.0
        %284 = vmatprep.subr.mxu0 0.0
        %285 = vmatpush1.msra.mxu0 0.0
        %286 = vmatprep.subr.mxu0 0.0
        %287 = vmatpush1.msra.mxu0 0.0
        %288 = vmatprep.subr.mxu0 0.0
        %289 = vmatpush1.msra.mxu0 0.0
        %290 = vmatprep.subr.mxu0 0.0
        %291 = vmatpush1.msra.mxu0 0.0
        %292 = vmatprep.subr.mxu0 0.0
        %293 = vmatpush1.msra.mxu0 0.0
        %294 = vmatprep.subr.mxu0 0.0
        %295 = vmatpush1.msra.mxu0 0.0
        %296 = vmatprep.subr.mxu0 0.0
        %297 = vmatpush1.msra.mxu0 0.0
        %298 = vmatprep.subr.mxu0 0.0
        %299 = vmatpush1.msra.mxu0 0.0
        %300 = vmatprep.subr.mxu0 0.0
        %301 = vmatpush1.msra.mxu0 0.0
        %302 = vmatprep.subr.mxu0 0.0
        %303 = vmatpush1.msra.mxu0 0.0
        %304 = vmatprep.subr.mxu0 0.0
        %305 = vmatpush1.msra.mxu0 0.0
        %306 = vmatprep.subr.mxu0 0.0
        %307 = vmatpush1.msra.mxu0 0.0
        %308 = vmatprep.subr.mxu0 0.0
        %309 = vmatpush1.msra.mxu0 0.0
        %310 = vmatprep.subr.mxu0 0.0
        %311 = vmatpush1.msra.mxu0 0.0
        %312 = vmatprep.mubr.f32.mxu0 0.0
        %313 = vmatmul.mubr.f32.gmra.mrb[0].mxu0 %v243
        %v314 = vpop.f32.mrb[0].mxu0
        %v315 = vadd.f32 %v234, %v314
        %v316 = vpop.f32.mrb[0].mxu0
        %v317 = vadd.f32 %v234, %v316
        %318 = vmatprep.mubr.f32.mxu0 0.0
        %319 = vmatmul.mubr.f32.gmra.mrb[0].mxu0 %v246
        %v320 = vpop.f32.mrb[0].mxu0
        %v321 = vadd.f32 %v239, %v320
        %v322 = vpop.f32.mrb[0].mxu0
        %v323 = vadd.f32 %v239, %v322
        %324 = vdwg.mxu0
        %325 = vst [vmem:[%s217] sm:$0xff] %v315
        %326 = vst [vmem:[%s217 + $0x8] sm:$0xff] %v317
        %327 = vst [vmem:[%s217 + $0x10] sm:$0x3] %v321
        %328 = vst [vmem:[%s217 + $0x18] sm:$0x3] %v323
        %v329 = vsub.f32 0.0, %v321
        %v330 = vsub.f32 0.0, %v323
        %v331 = vmul.f32 %v329, 1.442695
        %v332 = vpow.pop %v331
        %v333 = vmul.f32 %v330, 1.442695
        %v334 = vpow.pop %v333
        %v335 = vadd.f32 %v332, 1.0
        %v336 = vadd.f32 %v334, 1.0
        %v337 = vrcp.pop %v335
        %v338 = vmul.f32 1.0, %v337
        %v339 = vrcp.pop %v336
        %v340 = vmul.f32 1.0, %v339
        %v343 = vcombine.low %v338, %v340
        %v345 = vunpack.c.l.s4 1966171168
        %v346 = vunpack.c.0.s8 %v345
        %v347 = vlaneseq
        %v348 = vshrl.u32 %v347, 7
        %v349 = vsub.s32 %v346, %v348
        %v350 = vrot.slane %v343, %v349
        %v352 = vunpack.c.l.s4 1966171168
        %v353 = vunpack.c.0.s8 %v352
        %v354 = vlaneseq
        %v355 = vshrl.u32 %v354, 7
        %v356 = vsub.s32 %v353, %v355
        %v357 = vrot.slane %v350, %v356
        %v358 = vcombine.high %v357, %v357
        %v360 = vlaneseq
        %vm361 = vcmp.ge.s32.totalorder %v360, 0
        %vm362 = vcmp.lt.s32.totalorder %v360, 256
        %vm363 = vmand %vm361, %vm362
        %s364 = scalar_lea.vmem %s217, 18
        %365 = vst.msk [vmem:[%s364] ss:$8 sm:$0x3] %vm363, %v358
        %366 = vst.msk [vmem:[%s364] ss:$8 sm:$0x0] %vm363, %v358
        %s367 = smul.u32 2, %s22
        %p368 = scmp.lt.s32.totalorder %s21, 1
        %s369 = scalar_select %p368, %s21, 1
        %p370 = scmp.lt.s32.totalorder %s367, 1
        %s371 = scalar_select %p370, %s367, 1
        %s372 = smul.addr %s369, 4
        %s373 = sadd.s32 %s371, %s372
        %s374 = smul.addr %s373, 8
        %s375 = scalar_lea.vmem %s3, %s374
        // Predicated region
        $region37: #{tpu_custom_call.1} parent=31 // pred_check
          %p376 = pneg %p119
        $region38: #{tpu_custom_call.1} parent=31 // pred_check_branch
          %378 = sbr.rel (%p376) target = $region40
        $region39: #{tpu_custom_call.1} parent=31 // pred_region
          %s379 = smul.u32 2, %s22
        $region40: #{tpu_custom_call.1} parent=31 // pred_fallthru
          _
      $region32: #{tpu_custom_call.1} parent=5 // pred_fallthru
        _
      %p380 = scmp.le.s32.totalorder 2, %s12
      // Predicated region
      $region41: #{tpu_custom_call.1} parent=5 // pred_check
        %p381 = pneg %p380
      $region42: #{tpu_custom_call.1} parent=5 // pred_check_branch
        %383 = sbr.rel (%p381) target = $region44
      $region43: #{tpu_custom_call.1} parent=5 // pred_region
        %s384 = ssub.s32 %s12, 2
        // Predicated region
        $region45: #{tpu_custom_call.1} parent=43 // pred_check
          %p385 = pneg %p125
        $region46: #{tpu_custom_call.1} parent=43 // pred_check_branch
          %387 = sbr.rel (%p385) target = $region48
        $region47: #{tpu_custom_call.1} parent=43 // pred_region
          %s388 = smul.u32 2, %s24
          %p389 = scmp.lt.s32.totalorder %s23, 1
          %s390 = scalar_select %p389, %s23, 1
          %p391 = scmp.lt.s32.totalorder %s388, 1
          %s392 = scalar_select %p391, %s388, 1
          %s393 = smul.addr %s390, 4
          %s394 = sadd.s32 %s392, %s393
          %s395 = smul.addr %s394, 8
          %s396 = scalar_lea.vmem %s3, %s395
        $region48: #{tpu_custom_call.1} parent=43 // pred_fallthru
          _
      $region44: #{tpu_custom_call.1} parent=5 // pred_fallthru
        _
    $region6: #{tpu_custom_call.1} parent=1 // loop_footer
      %s16 = sadd.s32 1, %s12
    $region7: #{tpu_custom_call.1} parent=1 // loop_footer_branch
      %11 = sbr.rel target = $region3
    $region8: #{tpu_custom_call.1} parent=1 // loop_exit
      _
    %397 = vsyncpa [#allocation3], 1
    %s398 = scalar_lea.sflag [#allocation3], 1
    %399 = vsyncpa %s398, 1

</llo_original>
